<compile_context>
chip_gen: v7x
topology: tpu7x:2x2x1
jax: 0.10.0
libtpu: 0.0.40
codegen_flags: <defaults>
</compile_context>

<pallas_src>
import functools

import jax
import jax.numpy as jnp
from jax import lax
from jax.experimental import pallas as pl
from jax.experimental.pallas import tpu as pltpu

_LANE = 128

_CompilerParams = getattr(pltpu, "CompilerParams", None)
if _CompilerParams is None:  # older naming fallback
    _CompilerParams = getattr(pltpu, "TPUCompilerParams")


def _round_up(v, m):
    return ((v + m - 1) // m) * m


def _vmem_limit_bytes():
    """Per-generation scoped-VMEM limit: ~3/4 of physical capacity, capped."""
    cap = None
    try:
        cap = getattr(pltpu.get_tpu_info(), "vmem_capacity_bytes", None)
    except Exception:
        cap = None
    if not cap:
        cap = 64 * 1024 * 1024  # conservative fallback = v7x physical VMEM
    return int(min((cap * 3) // 4, 100 * 1024 * 1024))


def _pick_hw_tile(hw, c, fp, kp, lane_chunk, vmem_limit):
    """Prefer hw_tile == HW (one contiguous DMA + one grid step per image)."""
    fixed = (2 * fp * c * 2              # w1t bf16, double-buffered
             + fp * 4                    # b1 f32
             + 2 * fp * kp * 2           # w2 bf16, double-buffered
             + kp * 4                    # b2 f32
             + fp * _LANE * 4            # lane-dense pooled-sum accumulator
             + 4 * fp * lane_chunk * 4   # f32 h / SiLU temps for one in-kernel chunk
             + 2 * kp * 4                # probs block, double-buffered
             + (2 << 20))                # slack for compiler temporaries
    per_lane = 2 * c * 2                 # double-buffered bf16 image tile, per lane
    max_lanes = max((vmem_limit - fixed) // per_lane, 0)
    if hw <= max_lanes:
        return hw
    t = (min(hw, max_lanes) // _LANE) * _LANE
    while t >= _LANE:
        if hw % t == 0:
            return t
        t -= _LANE
    # TODO(synk): images whose bf16 [C, HW] slab cannot fit VMEM and whose HW has no
    #             128-multiple divisor would need masked partial tiles; not needed here.
    return hw


def _classify_kernel(x_ref, w1t_ref, b1_ref, w2_ref, b2_ref, probs_ref, acc_ref,
                     *, hw_tile, lane_chunk):
    # x_ref:   (1, C, hw_tile) bf16  one spatial tile of one image (lane-dense HW)
    # w1t_ref: (Fp, C) bf16 (normalization folded in), b1_ref: (Fp, 1) f32
    # w2_ref:  (Fp, Kp) bf16 (1/HW folded in),          b2_ref: (1, Kp) f32
    # probs:   (1, 1, Kp) f32
    # acc_ref: (Fp, 128) f32 lane-dense pooled-sum accumulator
    t = pl.program_id(1)

    @pl.when(t == 0)
    def _init():
        acc_ref[...] = jnp.zeros_like(acc_ref)

    w1t = w1t_ref[...]              # (Fp, C)  bf16
    b1 = b1_ref[...]                # (Fp, 1)  f32

    def accum_segment(start, width):
        # 1x1 conv (+ folded normalization) on `width` lanes of the [C, HW] image view.
        xc = x_ref[0, :, pl.ds(start, width)]                       # (C, width) bf16
        h = jnp.dot(w1t, xc, preferred_element_type=jnp.float32)    # (Fp, width) f32
        h = h + b1                                                  # lane-broadcast bias
        h = h * jax.nn.sigmoid(h)                                   # SiLU
        # Lane-dense pooled-sum accumulation: plain VPU adds of 128-lane slices;
        # the 128 -> 1 cross-lane fold is deferred to _finalize.
        n_full = width // _LANE
        for j in range(n_full):
            acc_ref[...] += h[:, j * _LANE:(j + 1) * _LANE]
        tail = width - n_full * _LANE
        if tail:
            acc_ref[:, :tail] += h[:, n_full * _LANE:]

    n_chunks = hw_tile // lane_chunk
    rem = hw_tile - n_chunks * lane_chunk
    if n_chunks > 0:
        def _chunk_body(i, carry):
            accum_segment(pl.multiple_of(i * lane_chunk, _LANE), lane_chunk)
            return carry
        lax.fori_loop(0, n_chunks, _chunk_body, 0)
    if rem:
        accum_segment(n_chunks * lane_chunk, rem)

    @pl.when(t == pl.num_programs(1) - 1)
    def _finalize():
        # Classifier on the MXU: transpose the (Fp, 128) accumulator once (both dims
        # 128-aligned), contract Fp against bf16 w2 (1/HW folded in), then fold the
        # 128 accumulator lanes (now sublanes) with a single reduce + bias.
        acc_t = acc_ref[...].T.astype(jnp.bfloat16)                 # (128, Fp)
        part = jnp.dot(acc_t, w2_ref[...],
                       preferred_element_type=jnp.float32)          # (128, Kp) f32
        logits = jnp.sum(part, axis=0, keepdims=True) + b2_ref[...]  # (1, Kp) f32
        m = jnp.max(logits, axis=-1, keepdims=True)
        e = jnp.exp(logits - m)                                     # padded classes -> 0
        denom = jnp.sum(e, axis=-1, keepdims=True)
        probs_ref[0] = e * pl.reciprocal(denom, approx=True)


def pallas_classify(x_nchw, mean, std, w1, b1, w2, b2, hw_tile=None, lane_chunk=512):
    """x_nchw: [B, C, H, W] float32. Returns softmax probabilities [B, K] (float32)."""
    B, C, H, W = x_nchw.shape
    HW = H * W
    F = w1.shape[1]
    K = w2.shape[1]
    Fp = _round_up(F, _LANE)            # feature dim padded (zero rows -> zero effect)
    Kp = _round_up(K, _LANE)            # lane-dense class dimension
    assert lane_chunk % _LANE == 0

    vmem_limit = _vmem_limit_bytes()
    if hw_tile is None:
        hw_tile = _pick_hw_tile(HW, C, Fp, Kp, lane_chunk, vmem_limit)
    assert HW % hw_tile == 0, "HW must be divisible by hw_tile"
    n_hw_tiles = HW // hw_tile
    inv_hw = 1.0 / float(HW)

    # ---- host-side (trace-time) parameter prep: exact, free layout plumbing ----
    # NCHW -> [B, C, HW] is a free reshape (no transpose); bf16 halves DMA bytes.
    x = x_nchw.reshape(B, C, HW).astype(jnp.bfloat16)

    # Fold the transforms' per-channel normalization into the 1x1 conv (linear -> exact).
    inv_std = 1.0 / std                                               # (1, C)
    w1_fold = w1 * inv_std.reshape(C, 1)                              # (C, F)
    b1_fold = b1 - (mean * inv_std) @ w1                              # (1, F)
    w1t = (jnp.zeros((Fp, C), jnp.float32)
           .at[:F].set(w1_fold.T).astype(jnp.bfloat16))               # (Fp, C) bf16
    b1c = jnp.zeros((Fp, 1), jnp.float32).at[:F].set(b1_fold.reshape(F, 1))

    # Fold 1/HW into the classifier weights; pad F with zeros and classes with -1e30
    # bias (exactly zero probability). Padded probabilities are sliced off outside.
    w2p = (jnp.zeros((Fp, Kp), jnp.float32)
           .at[:F, :K].set(w2 * inv_hw).astype(jnp.bfloat16))         # (Fp, Kp) bf16
    b2p = jnp.full((1, Kp), -1e30, jnp.float32).at[:, :K].set(b2)     # (1, Kp) f32

    kern = functools.partial(_classify_kernel, hw_tile=hw_tile, lane_chunk=lane_chunk)
    probs = pl.pallas_call(
        kern,
        out_shape=jax.ShapeDtypeStruct((B, 1, Kp), jnp.float32),
        grid_spec=pltpu.PrefetchScalarGridSpec(
            num_scalar_prefetch=0,
            grid=(B, n_hw_tiles),                       # reduction (HW) axis last
            in_specs=[
                pl.BlockSpec((1, C, hw_tile), lambda b, t: (b, 0, t)),  # image tile
                pl.BlockSpec((Fp, C), lambda b, t: (0, 0)),             # w1t (folded)
                pl.BlockSpec((Fp, 1), lambda b, t: (0, 0)),             # b1 (folded)
                pl.BlockSpec((Fp, Kp), lambda b, t: (0, 0)),            # w2 (scaled, padded)
                pl.BlockSpec((1, Kp), lambda b, t: (0, 0)),             # b2 (padded)
            ],
            out_specs=pl.BlockSpec((1, 1, Kp), lambda b, t: (b, 0, 0)),
            scratch_shapes=[pltpu.VMEM((Fp, _LANE), jnp.float32)],
        ),
        compiler_params=_CompilerParams(
            dimension_semantics=("parallel", "arbitrary"),
            vmem_limit_bytes=vmem_limit),
    )(x, w1t, b1c, w2p, b2p)

    return probs.reshape(B, Kp)[:, :K]


def _reference_classify(x_nchw, mean, std, w1, b1, w2, b2):
    """Pure-JAX float32 reference for correctness checking."""
    B, C, H, W = x_nchw.shape
    xt = jnp.transpose(x_nchw, (0, 2, 3, 1)).reshape(B, H * W, C)
    xn = (xt - mean[None]) / std[None]
    h = jnp.einsum("bhc,cf->bhf", xn, w1) + b1[None]
    h = h * jax.nn.sigmoid(h)
    pooled = jnp.mean(h, axis=1)                 # [B, F]
    logits = pooled @ w2 + b2
    return jax.nn.softmax(logits, axis=1)


def smriti_forward(x_nchw, params, categories, topk=5, hw_tile=None, lane_chunk=512):
    """Mirrors SmritiClassificationPyTorchModule.forward semantics."""
    mean, std, w1, b1, w2, b2 = params
    probs = pallas_classify(x_nchw, mean, std, w1, b1, w2, b2,
                            hw_tile=hw_tile, lane_chunk=lane_chunk)
    # TODO(synk): torch.topk has no clean in-kernel Pallas equivalent; done host-side
    #             (the PyTorch module already forces host sync via .item()).
    top_prob, top_class = jax.lax.top_k(probs, topk)
    top_prob = jax.device_get(top_prob)
    top_class = jax.device_get(top_class)
    # The PyTorch module builds the dict from batch element 0 only.
    return ({categories[int(top_class[0][i])]: float(top_prob[0][i])
             for i in range(topk)}, probs)


if __name__ == "__main__":
    # Small synthetic shapes consistent with the forward pass.
    B, C, H, W = 2, 4, 16, 16     # image batch (NCHW at the wrapper boundary)
    F = 32                        # pointwise-conv feature width
    K = 16                        # number of classes
    TOPK = 5

    key = jax.random.PRNGKey(0)
    kx, kw1, kb1, kw2, kb2 = jax.random.split(key, 5)

    x = jax.random.uniform(kx, (B, C, H, W), dtype=jnp.float32)  # image in [0, 1]
    # TODO(synk): transforms' resize/center-crop have no Pallas equivalent; the input
    #             is assumed already at target resolution, normalization is folded
    #             into w1/b1.
    mean = jnp.full((1, C), 0.485, dtype=jnp.float32)
    std = jnp.full((1, C), 0.229, dtype=jnp.float32)

    w1 = 0.1 * jax.random.normal(kw1, (C, F), dtype=jnp.float32)
    b1 = 0.1 * jax.random.normal(kb1, (1, F), dtype=jnp.float32)
    w2 = 0.1 * jax.random.normal(kw2, (F, K), dtype=jnp.float32)
    b2 = 0.1 * jax.random.normal(kb2, (1, K), dtype=jnp.float32)

    categories = [f"class_{i}" for i in range(K)]
    params = (mean, std, w1, b1, w2, b2)

    ref = _reference_classify(x, mean, std, w1, b1, w2, b2)

    # Run 1 (default): hw_tile = HW -> one grid step + one contiguous DMA per image.
    result_dict, probs = smriti_forward(x, params, categories, topk=TOPK)
    probs = jax.block_until_ready(probs)

    assert probs.shape == (B, K)
    assert jnp.allclose(probs, ref, atol=5e-3, rtol=1e-2), "mismatch vs reference"
    assert abs(float(jnp.sum(probs[0])) - 1.0) < 1e-2
    assert len(result_dict) == TOPK

    # Run 2: exercise the multi-tile accumulator path and the in-kernel chunk loop
    # (hw_tile=128 -> 2 grid steps per image; lane_chunk=128 -> fori_loop chunking).
    probs_tiled = pallas_classify(x, mean, std, w1, b1, w2, b2,
                                  hw_tile=128, lane_chunk=128)
    probs_tiled = jax.block_until_ready(probs_tiled)
    assert jnp.allclose(probs_tiled, ref, atol=5e-3, rtol=1e-2), "tiled mismatch"

    print("KERNEL_OK")
</pallas_src>

<mosaic_0001>
module attributes {stable_mosaic.version = 11 : i64} {
  func.func @_classify_kernel(%arg0: i32, %arg1: i32, %arg2: memref<1x4x256xbf16, #tpu.memory_space<vmem>>, %arg3: memref<128x4xbf16, #tpu.memory_space<vmem>>, %arg4: memref<128x1xf32, #tpu.memory_space<vmem>>, %arg5: memref<128x128xbf16, #tpu.memory_space<vmem>>, %arg6: memref<1x128xf32, #tpu.memory_space<vmem>>, %arg7: memref<1x1x128xf32, #tpu.memory_space<vmem>>, %arg8: memref<128x128xf32, #tpu.memory_space<vmem>>) attributes {dimension_semantics = [#tpu.dimension_semantics<parallel>, #tpu.dimension_semantics<arbitrary>], iteration_bounds = array<i64: 2, 1>, scalar_prefetch = 0 : i64, scratch_operands = 1 : i64, tpu.core_type = #tpu.core_type<tc>, window_params = [{transform_indices = @transform_0, window_bounds = array<i64: 1, 4, 256>}, {pipeline_mode = #tpu.pipeline_mode<synchronous>, transform_indices = @transform_1, window_bounds = array<i64: 128, 4>}, {pipeline_mode = #tpu.pipeline_mode<synchronous>, transform_indices = @transform_2, window_bounds = array<i64: 128, 1>}, {pipeline_mode = #tpu.pipeline_mode<synchronous>, transform_indices = @transform_3, window_bounds = array<i64: 128, 128>}, {pipeline_mode = #tpu.pipeline_mode<synchronous>, transform_indices = @transform_4, window_bounds = array<i64: 1, 128>}, {transform_indices = @transform_5, window_bounds = array<i64: 1, 1, 128>}]} {
    %c0_i32 = arith.constant 0 : i32
    %0 = arith.cmpi eq, %arg1, %c0_i32 : i32
    %1 = arith.extui %0 : i1 to i32
    %c0_i32_0 = arith.constant 0 : i32
    %2 = arith.cmpi ne, %1, %c0_i32_0 : i32
    scf.if %2 {
      %cst_18 = arith.constant 0.000000e+00 : f32
      %27 = vector.broadcast %cst_18 : f32 to vector<128x128xf32>
      %c0_19 = arith.constant 0 : index
      %c0_20 = arith.constant 0 : index
      %28 = vector.load %arg8[%c0_19, %c0_20] : memref<128x128xf32, #tpu.memory_space<vmem>>, vector<128x128xf32>
      tpu.vector_store %arg8[%c0_19, %c0_20], %27 {strides = array<i32>} : memref<128x128xf32, #tpu.memory_space<vmem>>, vector<128x128xf32>,
    } else {
    }
    %c0 = arith.constant 0 : index
    %c0_1 = arith.constant 0 : index
    %3 = vector.load %arg3[%c0, %c0_1] : memref<128x4xbf16, #tpu.memory_space<vmem>>, vector<128x4xbf16>
    %c0_2 = arith.constant 0 : index
    %c0_3 = arith.constant 0 : index
    %4 = vector.load %arg4[%c0_2, %c0_3] : memref<128x1xf32, #tpu.memory_space<vmem>>, vector<128x1xf32>
    %c0_4 = arith.constant 0 : index
    %c0_5 = arith.constant 0 : index
    %c0_6 = arith.constant 0 : index
    %5 = vector.load %arg2[%c0_4, %c0_5, %c0_6] : memref<1x4x256xbf16, #tpu.memory_space<vmem>>, vector<1x4x256xbf16>
    %6 = vector.shape_cast %5 : vector<1x4x256xbf16> to vector<4x256xbf16>
    %cst = arith.constant dense<0.000000e+00> : vector<128x256xf32>
    %7 = tpu.matmul %3, %6, %cst {dimension_numbers = #tpu.dot_dimension_numbers<[1], [0], [0], [1], [0, 0, 1, 1], [], []>} : vector<128x4xbf16>, vector<4x256xbf16>, vector<128x256xf32> -> vector<128x256xf32>
    %8 = vector.broadcast %4 : vector<128x1xf32> to vector<128x256xf32>
    %9 = arith.addf %7, %8 : vector<128x256xf32>
    %10 = arith.negf %9 : vector<128x256xf32>
    %11 = math.exp %10 : vector<128x256xf32>
    %cst_7 = arith.constant 1.000000e+00 : f32
    %12 = vector.broadcast %cst_7 : f32 to vector<128x256xf32>
    %13 = arith.addf %12, %11 : vector<128x256xf32>
    %14 = arith.divf %12, %13 : vector<128x256xf32>
    %15 = arith.mulf %9, %14 : vector<128x256xf32>
    %c0_8 = arith.constant 0 : index
    %c0_9 = arith.constant 0 : index
    %16 = vector.load %arg8[%c0_8, %c0_9] : memref<128x128xf32, #tpu.memory_space<vmem>>, vector<128x128xf32>
    %17 = vector.extract_strided_slice %15 {offsets = [0, 0], sizes = [128, 128], strides = [1, 1]} : vector<128x256xf32> to vector<128x128xf32>
    %18 = arith.addf %16, %17 : vector<128x128xf32>
    %c0_10 = arith.constant 0 : index
    %c0_11 = arith.constant 0 : index
    %19 = vector.load %arg8[%c0_10, %c0_11] : memref<128x128xf32, #tpu.memory_space<vmem>>, vector<128x128xf32>
    tpu.vector_store %arg8[%c0_10, %c0_11], %18 {strides = array<i32>} : memref<128x128xf32, #tpu.memory_space<vmem>>, vector<128x128xf32>,
    %c0_12 = arith.constant 0 : index
    %c0_13 = arith.constant 0 : index
    %20 = vector.load %arg8[%c0_12, %c0_13] : memref<128x128xf32, #tpu.memory_space<vmem>>, vector<128x128xf32>
    %21 = vector.extract_strided_slice %15 {offsets = [0, 128], sizes = [128, 128], strides = [1, 1]} : vector<128x256xf32> to vector<128x128xf32>
    %22 = arith.addf %20, %21 : vector<128x128xf32>
    %c0_14 = arith.constant 0 : index
    %c0_15 = arith.constant 0 : index
    %23 = vector.load %arg8[%c0_14, %c0_15] : memref<128x128xf32, #tpu.memory_space<vmem>>, vector<128x128xf32>
    tpu.vector_store %arg8[%c0_14, %c0_15], %22 {strides = array<i32>} : memref<128x128xf32, #tpu.memory_space<vmem>>, vector<128x128xf32>,
    %c0_i32_16 = arith.constant 0 : i32
    %24 = arith.cmpi eq, %arg1, %c0_i32_16 : i32
    %25 = arith.extui %24 : i1 to i32
    %c0_i32_17 = arith.constant 0 : i32
    %26 = arith.cmpi ne, %25, %c0_i32_17 : i32
    scf.if %26 {
      %c0_18 = arith.constant 0 : index
      %c0_19 = arith.constant 0 : index
      %27 = vector.load %arg8[%c0_18, %c0_19] : memref<128x128xf32, #tpu.memory_space<vmem>>, vector<128x128xf32>
      %28 = tpu.transpose %27, [1, 0] : vector<128x128xf32> -> vector<128x128xf32>
      %29 = arith.truncf %28 : vector<128x128xf32> to vector<128x128xbf16>
      %c0_20 = arith.constant 0 : index
      %c0_21 = arith.constant 0 : index
      %30 = vector.load %arg5[%c0_20, %c0_21] : memref<128x128xbf16, #tpu.memory_space<vmem>>, vector<128x128xbf16>
      %cst_22 = arith.constant dense<0.000000e+00> : vector<128x128xf32>
      %31 = tpu.matmul %29, %30, %cst_22 {dimension_numbers = #tpu.dot_dimension_numbers<[1], [0], [0], [1], [0, 0, 1, 1], [], []>} : vector<128x128xbf16>, vector<128x128xbf16>, vector<128x128xf32> -> vector<128x128xf32>
      %cst_23 = arith.constant dense<0.000000e+00> : vector<128xf32>
      %32 = vector.multi_reduction <add>, %31, %cst_23 [0] : vector<128x128xf32> to vector<128xf32>
      %33 = vector.shape_cast %32 : vector<128xf32> to vector<1x128xf32>
      %c0_24 = arith.constant 0 : index
      %c0_25 = arith.constant 0 : index
      %34 = vector.load %arg6[%c0_24, %c0_25] : memref<1x128xf32, #tpu.memory_space<vmem>>, vector<1x128xf32>
      %35 = arith.addf %33, %34 : vector<1x128xf32>
      %cst_26 = arith.constant dense<0xFF800000> : vector<1xf32>
      %36 = vector.multi_reduction <maximumf>, %35, %cst_26 [1] : vector<1x128xf32> to vector<1xf32>
      %37 = vector.shape_cast %36 : vector<1xf32> to vector<1x1xf32>
      %38 = vector.broadcast %37 : vector<1x1xf32> to vector<1x128xf32>
      %39 = arith.subf %35, %38 : vector<1x128xf32>
      %40 = math.exp %39 : vector<1x128xf32>
      %cst_27 = arith.constant dense<0.000000e+00> : vector<1xf32>
      %41 = vector.multi_reduction <add>, %40, %cst_27 [1] : vector<1x128xf32> to vector<1xf32>
      %42 = vector.shape_cast %41 : vector<1xf32> to vector<1x1xf32>
      %43 = tpu.reciprocal %42 {approx = true} : vector<1x1xf32> -> vector<1x1xf32>
      %44 = vector.broadcast %43 : vector<1x1xf32> to vector<1x128xf32>
      %45 = arith.mulf %40, %44 : vector<1x128xf32>
      %c0_28 = arith.constant 0 : index
      %c0_29 = arith.constant 0 : index
      %c0_30 = arith.constant 0 : index
      %46 = vector.load %arg7[%c0_28, %c0_29, %c0_30] : memref<1x1x128xf32, #tpu.memory_space<vmem>>, vector<1x1x128xf32>
      %47 = vector.shape_cast %46 : vector<1x1x128xf32> to vector<1x128xf32>
      %48 = vector.shape_cast %45 : vector<1x128xf32> to vector<1x1x128xf32>
      tpu.vector_store %arg7[%c0_28, %c0_29, %c0_30], %48 {strides = array<i32>} : memref<1x1x128xf32, #tpu.memory_space<vmem>>, vector<1x1x128xf32>,
    } else {
    }
    return
  }
  func.func @transform_0(%arg0: i32, %arg1: i32) -> (i32, i32, i32) {
    %c0_i32 = arith.constant 0 : i32
    %c0_i32_0 = arith.constant 0 : i32
    return %arg0, %c0_i32, %arg1 : i32, i32, i32
  }
  func.func @transform_1(%arg0: i32, %arg1: i32) -> (i32, i32) {
    %c0_i32 = arith.constant 0 : i32
    %c0_i32_0 = arith.constant 0 : i32
    %c0_i32_1 = arith.constant 0 : i32
    return %c0_i32, %c0_i32_0 : i32, i32
  }
  func.func @transform_2(%arg0: i32, %arg1: i32) -> (i32, i32) {
    %c0_i32 = arith.constant 0 : i32
    %c0_i32_0 = arith.constant 0 : i32
    %c0_i32_1 = arith.constant 0 : i32
    return %c0_i32, %c0_i32_0 : i32, i32
  }
  func.func @transform_3(%arg0: i32, %arg1: i32) -> (i32, i32) {
    %c0_i32 = arith.constant 0 : i32
    %c0_i32_0 = arith.constant 0 : i32
    %c0_i32_1 = arith.constant 0 : i32
    return %c0_i32, %c0_i32_0 : i32, i32
  }
  func.func @transform_4(%arg0: i32, %arg1: i32) -> (i32, i32) {
    %c0_i32 = arith.constant 0 : i32
    %c0_i32_0 = arith.constant 0 : i32
    %c0_i32_1 = arith.constant 0 : i32
    return %c0_i32, %c0_i32_0 : i32, i32
  }
  func.func @transform_5(%arg0: i32, %arg1: i32) -> (i32, i32, i32) {
    %c0_i32 = arith.constant 0 : i32
    %c0_i32_0 = arith.constant 0 : i32
    %c0_i32_1 = arith.constant 0 : i32
    return %arg0, %c0_i32, %c0_i32_0 : i32, i32, i32
  }
}

</mosaic_0001>

<llo_original>
// kernel: tpu_custom_call.1
$region0: #{tpu_custom_call.1}
  #allocation0 [shape = 'u32[]', space=smem, size = 0x4, offset = 0x4, fixed_abs, tag = 'smem constant byte address 0x4 - core index']
  #allocation1 [shape = 'u32[144,128]{1,0:T(1,128)}', space=vmem, size = 0x12000, scoped, tag = 'internal scratch']
  #allocation2 [shape = 'f32[128,128]{1,0:T(8,128)}', space=vmem, size = 0x10000, scoped, tag = 'scratch operand']
  %s0 = inlined_call_operand.vmem [shape: bf16[2,4,256], index: 0, kind: input, shape index: {}]
  %s1 = inlined_call_operand.vmem [shape: bf16[128,4], index: 1, kind: input, shape index: {}]
  %s2 = inlined_call_operand.vmem [shape: f32[128,1], index: 2, kind: input, shape index: {}]
  %s3 = inlined_call_operand.vmem [shape: bf16[128,128], index: 3, kind: input, shape index: {}]
  %s4 = inlined_call_operand.vmem [shape: f32[1,128], index: 4, kind: input, shape index: {}]
  %s5 = inlined_call_operand.hbm [shape: f32[2,1,128], index: 5, kind: output, shape index: {}]
  %s6 = sld [smem:[#allocation0]]
  $region61: #{tpu_custom_call.1} parent=0
    _
  %s8 = ssub.s32 1, %s6
  %s9 = scalar_select 0, %s8, %s6
  $region1: #{tpu_custom_call.1} parent=0
    #allocation3 [shape = 'u8[1024]{0}', space=vmem, size = 0x400, scoped, tag = 'output window, operand 0']
    #allocation4 [shape = 's32[2]{0}', space=sflag, size = 0x8, scoped, tag = 'scoped memory for tpu_custom_call.1']
    %10 = vsyncpa [#allocation4], 0
    %s11 = scalar_lea.sflag [#allocation4], 1
    %12 = vsyncpa %s11, 0
    loop: start=0, step=1, limit=4
    $region2: #{tpu_custom_call.1} parent=1 // loop_pre_header
      _
    $region3: #{tpu_custom_call.1} parent=1 // loop_header
      %s14 = sphi 0, %s18
      %p15 = scmp.ge.s32.totalorder %s14, 4
      %s21 = sphi 0, %s33
      %s22 = sphi 0, %s29
      %s23 = sphi 0, %s21
      %s24 = sphi 0, %s22
      %s25 = sphi 0, %s23
      %s26 = sphi 0, %s24
      %s38 = sphi 0, %s40
      %s41 = sphi 0, %s38
      %s42 = sphi 0, %s41
      %s58 = sphi 0, %s42
      %s62 = sphi 0, %s62
      %s64 = sphi 0, %s62
      %s65 = sphi 0, %s64
      %s79 = sphi 0, %s65
      %s83 = sphi 0, %s83
      %s85 = sphi 0, %s83
      %s86 = sphi 0, %s85
      %s100 = sphi 0, %s86
      %s104 = sphi 0, %s104
      %s106 = sphi 0, %s104
      %s107 = sphi 0, %s106
      %s121 = sphi 0, %s107
      %s125 = sphi 0, %s125
      %s127 = sphi 0, %s125
      %s128 = sphi 0, %s127
      %s142 = sphi 0, %s128
      %s148 = sphi 0, %s150
      %s151 = sphi 0, %s148
      %s152 = sphi 0, %s151
      %s168 = sphi 0, %s152
    $region4: #{tpu_custom_call.1} parent=1 // loop_header_branch
      %17 = sbr.rel (%p15) target = $region8
    $region5: #{tpu_custom_call.1} parent=1 // loop_body
      %s19 = ssub.s32 %s14, 1
      %s20 = ssub.s32 %s14, 2
      %s27 = sadd.s32 1, %s22
      %p28 = scmp.ge.s32.totalorder %s27, 1
      %s29 = scalar_select %p28, 0, %s27
      %s30 = sadd.s32 1, %s21
      %s31 = scalar_select %p28, %s30, %s21
      %p32 = scmp.ge.s32.totalorder %s31, 2
      %s33 = scalar_select %p32, 0, %s31
      %s34 = ssub.s32 %s21, %s33
      %s35 = ssub.s32 %s22, %s29
      %s36 = sor.u32 %s34, %s35
      %p37 = scmp.eq.s32.totalorder %s36, 0
      %s39 = sadd.s32 %s38, 1
      %s40 = scalar_select %p37, %s38, %s39
      %p43 = pneg %p37
      %p44 = scmp.eq.s32.totalorder %s14, 1
      %p45 = por %p43, %p44
      %p46 = scmp.ne.s32.totalorder %s38, %s41
      %p47 = scmp.eq.s32.totalorder %s14, 0
      %p48 = por %p46, %p47
      %p49 = scmp.ne.s32.totalorder %s38, %s41
      %p50 = scmp.eq.s32.totalorder %s19, 1
      %p51 = por %p49, %p50
      %p52 = scmp.ne.s32.totalorder %s41, %s42
      %p53 = scmp.eq.s32.totalorder %s19, 0
      %p54 = por %p52, %p53
      %p55 = scmp.ne.s32.totalorder %s41, %s42
      %p56 = scmp.eq.s32.totalorder %s20, 1
      %p57 = por %p55, %p56
      %p59 = scmp.ne.s32.totalorder %s42, %s58
      %p60 = scmp.eq.s32.totalorder %s20, 0
      %p61 = por %p59, %p60
      %s63 = sadd.s32 %s62, 1
      %p66 = scmp.eq.s32.totalorder %s14, 1
      %p67 = scmp.ne.s32.totalorder %s62, %s64
      %p68 = scmp.eq.s32.totalorder %s14, 0
      %p69 = por %p67, %p68
      %p70 = scmp.ne.s32.totalorder %s62, %s64
      %p71 = scmp.eq.s32.totalorder %s19, 1
      %p72 = por %p70, %p71
      %p73 = scmp.ne.s32.totalorder %s64, %s65
      %p74 = scmp.eq.s32.totalorder %s19, 0
      %p75 = por %p73, %p74
      %p76 = scmp.ne.s32.totalorder %s64, %s65
      %p77 = scmp.eq.s32.totalorder %s20, 1
      %p78 = por %p76, %p77
      %p80 = scmp.ne.s32.totalorder %s65, %s79
      %p81 = scmp.eq.s32.totalorder %s20, 0
      %p82 = por %p80, %p81
      %s84 = sadd.s32 %s83, 1
      %p87 = scmp.eq.s32.totalorder %s14, 1
      %p88 = scmp.ne.s32.totalorder %s83, %s85
      %p89 = scmp.eq.s32.totalorder %s14, 0
      %p90 = por %p88, %p89
      %p91 = scmp.ne.s32.totalorder %s83, %s85
      %p92 = scmp.eq.s32.totalorder %s19, 1
      %p93 = por %p91, %p92
      %p94 = scmp.ne.s32.totalorder %s85, %s86
      %p95 = scmp.eq.s32.totalorder %s19, 0
      %p96 = por %p94, %p95
      %p97 = scmp.ne.s32.totalorder %s85, %s86
      %p98 = scmp.eq.s32.totalorder %s20, 1
      %p99 = por %p97, %p98
      %p101 = scmp.ne.s32.totalorder %s86, %s100
      %p102 = scmp.eq.s32.totalorder %s20, 0
      %p103 = por %p101, %p102
      %s105 = sadd.s32 %s104, 1
      %p108 = scmp.eq.s32.totalorder %s14, 1
      %p109 = scmp.ne.s32.totalorder %s104, %s106
      %p110 = scmp.eq.s32.totalorder %s14, 0
      %p111 = por %p109, %p110
      %p112 = scmp.ne.s32.totalorder %s104, %s106
      %p113 = scmp.eq.s32.totalorder %s19, 1
      %p114 = por %p112, %p113
      %p115 = scmp.ne.s32.totalorder %s106, %s107
      %p116 = scmp.eq.s32.totalorder %s19, 0
      %p117 = por %p115, %p116
      %p118 = scmp.ne.s32.totalorder %s106, %s107
      %p119 = scmp.eq.s32.totalorder %s20, 1
      %p120 = por %p118, %p119
      %p122 = scmp.ne.s32.totalorder %s107, %s121
      %p123 = scmp.eq.s32.totalorder %s20, 0
      %p124 = por %p122, %p123
      %s126 = sadd.s32 %s125, 1
      %p129 = scmp.eq.s32.totalorder %s14, 1
      %p130 = scmp.ne.s32.totalorder %s125, %s127
      %p131 = scmp.eq.s32.totalorder %s14, 0
      %p132 = por %p130, %p131
      %p133 = scmp.ne.s32.totalorder %s125, %s127
      %p134 = scmp.eq.s32.totalorder %s19, 1
      %p135 = por %p133, %p134
      %p136 = scmp.ne.s32.totalorder %s127, %s128
      %p137 = scmp.eq.s32.totalorder %s19, 0
      %p138 = por %p136, %p137
      %p139 = scmp.ne.s32.totalorder %s127, %s128
      %p140 = scmp.eq.s32.totalorder %s20, 1
      %p141 = por %p139, %p140
      %p143 = scmp.ne.s32.totalorder %s128, %s142
      %p144 = scmp.eq.s32.totalorder %s20, 0
      %p145 = por %p143, %p144
      %s146 = ssub.s32 %s21, %s33
      %p147 = scmp.eq.s32.totalorder %s146, 0
      %s149 = sadd.s32 %s148, 1
      %s150 = scalar_select %p147, %s148, %s149
      %p153 = pneg %p147
      %p154 = scmp.eq.s32.totalorder %s14, 1
      %p155 = por %p153, %p154
      %p156 = scmp.ne.s32.totalorder %s148, %s151
      %p157 = scmp.eq.s32.totalorder %s14, 0
      %p158 = por %p156, %p157
      %p159 = scmp.ne.s32.totalorder %s148, %s151
      %p160 = scmp.eq.s32.totalorder %s19, 1
      %p161 = por %p159, %p160
      %p162 = scmp.ne.s32.totalorder %s151, %s152
      %p163 = scmp.eq.s32.totalorder %s19, 0
      %p164 = por %p162, %p163
      %p165 = scmp.ne.s32.totalorder %s151, %s152
      %p166 = scmp.eq.s32.totalorder %s20, 1
      %p167 = por %p165, %p166
      %p169 = scmp.ne.s32.totalorder %s152, %s168
      %p170 = scmp.eq.s32.totalorder %s20, 0
      %p171 = por %p169, %p170
      %p172 = scmp.le.s32.totalorder 1, %s14
      %p173 = scmp.lt.s32.totalorder %s14, 3
      %p174 = pnand %p172, %p173
      %p175 = pneg %p174
      // Predicated region
      $region9: #{tpu_custom_call.1} parent=5 // pred_check
        _
      $region10: #{tpu_custom_call.1} parent=5 // pred_check_branch
        %177 = sbr.rel (%p174) target = $region12
      $region11: #{tpu_custom_call.1} parent=5 // pred_region
        %s178 = ssub.s32 %s14, 1
        // Predicated region
        $region13: #{tpu_custom_call.1} parent=11 // pred_check
          %p179 = pneg %p75
        $region14: #{tpu_custom_call.1} parent=11 // pred_check_branch
          %181 = sbr.rel (%p179) target = $region16
        $region15: #{tpu_custom_call.1} parent=11 // pred_region
          _
        $region16: #{tpu_custom_call.1} parent=11 // pred_fallthru
          _
        // Predicated region
        $region17: #{tpu_custom_call.1} parent=11 // pred_check
          %p182 = pneg %p96
        $region18: #{tpu_custom_call.1} parent=11 // pred_check_branch
          %184 = sbr.rel (%p182) target = $region20
        $region19: #{tpu_custom_call.1} parent=11 // pred_region
          _
        $region20: #{tpu_custom_call.1} parent=11 // pred_fallthru
          _
        // Predicated region
        $region21: #{tpu_custom_call.1} parent=11 // pred_check
          %p185 = pneg %p117
        $region22: #{tpu_custom_call.1} parent=11 // pred_check_branch
          %187 = sbr.rel (%p185) target = $region24
        $region23: #{tpu_custom_call.1} parent=11 // pred_region
          _
        $region24: #{tpu_custom_call.1} parent=11 // pred_fallthru
          _
        // Predicated region
        $region25: #{tpu_custom_call.1} parent=11 // pred_check
          %p188 = pneg %p138
        $region26: #{tpu_custom_call.1} parent=11 // pred_check_branch
          %190 = sbr.rel (%p188) target = $region28
        $region27: #{tpu_custom_call.1} parent=11 // pred_region
          _
        $region28: #{tpu_custom_call.1} parent=11 // pred_fallthru
          _
      $region12: #{tpu_custom_call.1} parent=5 // pred_fallthru
        _
      %p191 = scmp.lt.s32.totalorder %s14, 2
      // Predicated region
      $region29: #{tpu_custom_call.1} parent=5 // pred_check
        %p192 = pneg %p191
      $region30: #{tpu_custom_call.1} parent=5 // pred_check_branch
        %194 = sbr.rel (%p192) target = $region32
      $region31: #{tpu_custom_call.1} parent=5 // pred_region
        // Predicated region
        $region33: #{tpu_custom_call.1} parent=31 // pred_check
          %p195 = pneg %p48
        $region34: #{tpu_custom_call.1} parent=31 // pred_check_branch
          %197 = sbr.rel (%p195) target = $region36
        $region35: #{tpu_custom_call.1} parent=31 // pred_region
          %s198 = smul.u32 2, %s22
          %p199 = scmp.lt.s32.totalorder %s21, 1
          %s200 = scalar_select %p199, %s21, 1
          %p201 = scmp.lt.s32.totalorder %s198, 1
          %s202 = scalar_select %p201, %s198, 1
          %s203 = smul.addr %s200, 2
          %s204 = sadd.s32 %s202, %s203
          %s205 = smul.addr %s204, 2
          %s206 = scalar_lea.vmem %s0, %s205
          %s207 = smul.u32 2, %s22
        $region36: #{tpu_custom_call.1} parent=31 // pred_fallthru
          _
      $region32: #{tpu_custom_call.1} parent=5 // pred_fallthru
        _
      %p208 = scmp.le.s32.totalorder 1, %s14
      %p209 = scmp.lt.s32.totalorder %s14, 3
      %p210 = pnand %p208, %p209
      %p211 = pneg %p210
      // Predicated region
      $region37: #{tpu_custom_call.1} parent=5 // pred_check
        _
      $region38: #{tpu_custom_call.1} parent=5 // pred_check_branch
        %213 = sbr.rel (%p210) target = $region40
      $region39: #{tpu_custom_call.1} parent=5 // pred_region
        %s214 = ssub.s32 %s14, 1
        %s215 = smul.u32 2, %s24
        %p216 = scmp.lt.s32.totalorder %s23, 1
        %s217 = scalar_select %p216, %s23, 1
        %p218 = scmp.lt.s32.totalorder %s215, 1
        %s219 = scalar_select %p218, %s215, 1
        %s220 = smul.addr %s217, 2
        %s221 = sadd.s32 %s219, %s220
        %s222 = smul.addr %s221, 2
        %s223 = scalar_lea.vmem %s0, %s222
        %p224 = pneg %p54
        %p225 = pneg %p51
        %p226 = pneg %p75
        %p227 = pneg %p72
        %p228 = pneg %p96
        %p229 = pneg %p93
        %p230 = pneg %p117
        %p231 = pneg %p114
        %p232 = pneg %p138
        %p233 = pneg %p135
        %p234 = pneg %p164
        %p235 = pneg %p161
        %s236 = sand.u32 %s151, 1
        %s237 = scalar_lea.sflag [#allocation4], %s236
        %s238 = sand.u32 %s151, 1
        %s239 = scalar_lea.vmem [#allocation3], %s238
        %s240 = smul.u32 2, %s24
        %p241 = scmp.lt.s32.totalorder %s23, 1
        %s242 = scalar_select %p241, %s23, 1
        %p243 = scmp.lt.s32.totalorder %s240, 1
        %s244 = scalar_select %p243, %s240, 1
        %s245 = smul.addr %s242, 2
        %s246 = sadd.s32 %s244, %s245
        %s247 = smul.addr %s246, 2
        %s248 = scalar_lea.vmem %s0, %s247
        %s249 = smul.u32 2, %s24
        %p251 = scmp.eq.s32.totalorder %s24, 0
        // Predicated region
        $region41: #{tpu_custom_call.1} parent=39 // pred_check
          %p252 = pneg %p251
        $region42: #{tpu_custom_call.1} parent=39 // pred_check_branch
          %254 = sbr.rel (%p252) target = $region44
        $region43: #{tpu_custom_call.1} parent=39 // pred_region
          %255 = vst [vmem:[#allocation2] sm:$0xff] 0.0
          %256 = vst [vmem:[#allocation2 + $0x8] sm:$0xff] 0.0
          %257 = vst [vmem:[#allocation2 + $0x10] sm:$0xff] 0.0
          %258 = vst [vmem:[#allocation2 + $0x18] sm:$0xff] 0.0
          %259 = vst [vmem:[#allocation2 + $0x20] sm:$0xff] 0.0
          %260 = vst [vmem:[#allocation2 + $0x28] sm:$0xff] 0.0
          %261 = vst [vmem:[#allocation2 + $0x30] sm:$0xff] 0.0
          %262 = vst [vmem:[#allocation2 + $0x38] sm:$0xff] 0.0
          %263 = vst [vmem:[#allocation2 + $0x40] sm:$0xff] 0.0
          %264 = vst [vmem:[#allocation2 + $0x48] sm:$0xff] 0.0
          %265 = vst [vmem:[#allocation2 + $0x50] sm:$0xff] 0.0
          %266 = vst [vmem:[#allocation2 + $0x58] sm:$0xff] 0.0
          %267 = vst [vmem:[#allocation2 + $0x60] sm:$0xff] 0.0
          %268 = vst [vmem:[#allocation2 + $0x68] sm:$0xff] 0.0
          %269 = vst [vmem:[#allocation2 + $0x70] sm:$0xff] 0.0
          %270 = vst [vmem:[#allocation2 + $0x78] sm:$0xff] 0.0
        $region44: #{tpu_custom_call.1} parent=39 // pred_fallthru
          _
        %v271 = vld [vmem:[%s1] sm:$0xf]
        %v272 = vld [vmem:[%s1 + $0x4] sm:$0xf]
        %v273 = vld [vmem:[%s1 + $0x8] sm:$0xf]
        %v274 = vld [vmem:[%s1 + $0xc] sm:$0xf]
        %v275 = vld [vmem:[%s1 + $0x10] sm:$0xf]
        %v276 = vld [vmem:[%s1 + $0x14] sm:$0xf]
        %v277 = vld [vmem:[%s1 + $0x18] sm:$0xf]
        %v278 = vld [vmem:[%s1 + $0x1c] sm:$0xf]
        %v279 = vld [vmem:[%s1 + $0x20] sm:$0xf]
        %v280 = vld [vmem:[%s1 + $0x24] sm:$0xf]
        %v281 = vld [vmem:[%s1 + $0x28] sm:$0xf]
        %v282 = vld [vmem:[%s1 + $0x2c] sm:$0xf]
        %v283 = vld [vmem:[%s1 + $0x30] sm:$0xf]
        %v284 = vld [vmem:[%s1 + $0x34] sm:$0xf]
        %v285 = vld [vmem:[%s1 + $0x38] sm:$0xf]
        %v286 = vld [vmem:[%s1 + $0x3c] sm:$0xf]
        %v287 = vld [vmem:[%s2] sm:$0xff]
        %v288 = vld [vmem:[%s2 + $0x8] sm:$0xff]
        %v289 = vld [vmem:[%s2 + $0x10] sm:$0xff]
        %v290 = vld [vmem:[%s2 + $0x18] sm:$0xff]
        %v291 = vld [vmem:[%s2 + $0x20] sm:$0xff]
        %v292 = vld [vmem:[%s2 + $0x28] sm:$0xff]
        %v293 = vld [vmem:[%s2 + $0x30] sm:$0xff]
        %v294 = vld [vmem:[%s2 + $0x38] sm:$0xff]
        %v295 = vld [vmem:[%s2 + $0x40] sm:$0xff]
        %v296 = vld [vmem:[%s2 + $0x48] sm:$0xff]
        %v297 = vld [vmem:[%s2 + $0x50] sm:$0xff]
        %v298 = vld [vmem:[%s2 + $0x58] sm:$0xff]
        %v299 = vld [vmem:[%s2 + $0x60] sm:$0xff]
        %v300 = vld [vmem:[%s2 + $0x68] sm:$0xff]
        %v301 = vld [vmem:[%s2 + $0x70] sm:$0xff]
        %v302 = vld [vmem:[%s2 + $0x78] sm:$0xff]
        %v303 = vld [vmem:[%s248] sm:$0xf]
        %305 = vset.pattern.permute.xlu0 0
        %306 = vperm.xlu0 %305, %v287
        %v307 = vpop.permute.xlu0 %306
        %310 = vset.pattern.permute.xlu0 0
        %311 = vperm.xlu0 %310, %v288
        %v312 = vpop.permute.xlu0 %311
        %315 = vset.pattern.permute.xlu0 0
        %316 = vperm.xlu0 %315, %v289
        %v317 = vpop.permute.xlu0 %316
        %320 = vset.pattern.permute.xlu0 0
        %321 = vperm.xlu0 %320, %v290
        %v322 = vpop.permute.xlu0 %321
        %325 = vset.pattern.permute.xlu0 0
        %326 = vperm.xlu0 %325, %v291
        %v327 = vpop.permute.xlu0 %326
        %330 = vset.pattern.permute.xlu0 0
        %331 = vperm.xlu0 %330, %v292
        %v332 = vpop.permute.xlu0 %331
        %335 = vset.pattern.permute.xlu0 0
        %336 = vperm.xlu0 %335, %v293
        %v337 = vpop.permute.xlu0 %336
        %340 = vset.pattern.permute.xlu0 0
        %341 = vperm.xlu0 %340, %v294
        %v342 = vpop.permute.xlu0 %341
        %345 = vset.pattern.permute.xlu0 0
        %346 = vperm.xlu0 %345, %v295
        %v347 = vpop.permute.xlu0 %346
        %350 = vset.pattern.permute.xlu0 0
        %351 = vperm.xlu0 %350, %v296
        %v352 = vpop.permute.xlu0 %351
        %355 = vset.pattern.permute.xlu0 0
        %356 = vperm.xlu0 %355, %v297
        %v357 = vpop.permute.xlu0 %356
        %360 = vset.pattern.permute.xlu0 0
        %361 = vperm.xlu0 %360, %v298
        %v362 = vpop.permute.xlu0 %361
        %365 = vset.pattern.permute.xlu0 0
        %366 = vperm.xlu0 %365, %v299
        %v367 = vpop.permute.xlu0 %366
        %370 = vset.pattern.permute.xlu0 0
        %371 = vperm.xlu0 %370, %v300
        %v372 = vpop.permute.xlu0 %371
        %375 = vset.pattern.permute.xlu0 0
        %376 = vperm.xlu0 %375, %v301
        %v377 = vpop.permute.xlu0 %376
        %380 = vset.pattern.permute.xlu0 0
        %381 = vperm.xlu0 %380, %v302
        %v382 = vpop.permute.xlu0 %381
        %v400 = vunpack.c.l.b16 %v271
        %v401 = vunpack.c.l.b16 %v272
        %v402 = vunpack.c.l.b16 %v273
        %v403 = vunpack.c.l.b16 %v274
        %v404 = vunpack.c.l.b16 %v275
        %v405 = vunpack.c.l.b16 %v276
        %v406 = vunpack.c.l.b16 %v277
        %v407 = vunpack.c.l.b16 %v278
        %v408 = vunpack.c.l.b16 %v279
        %v409 = vunpack.c.l.b16 %v280
        %v410 = vunpack.c.l.b16 %v281
        %v411 = vunpack.c.l.b16 %v282
        %v412 = vunpack.c.l.b16 %v283
        %v413 = vunpack.c.l.b16 %v284
        %v414 = vunpack.c.l.b16 %v285
        %v415 = vunpack.c.l.b16 %v286
        %v416 = vpack.c.b16 %v401, %v400
        %v417 = vpack.c.b16 %v403, %v402
        %v418 = vpack.c.b16 %v405, %v404
        %v419 = vpack.c.b16 %v407, %v406
        %v420 = vpack.c.b16 %v409, %v408
        %v421 = vpack.c.b16 %v411, %v410
        %v422 = vpack.c.b16 %v413, %v412
        %v423 = vpack.c.b16 %v415, %v414
        %v426 = vunpack.c.l.s4 1983009808
        %v427 = vunpack.c.0.s8 %v426
        %v428 = vlaneseq
        %v429 = vshrl.u32 %v428, 7
        %v430 = vsub.s32 %v427, %v429
        %v431 = vrot.slane %v303, %v430
        %v432 = vcombine.high %v431, %v431
        %vm433 = vcmask 31744
        %v435 = vsel %vm433, %v416, 0
        %v438 = vsel %vm433, %v417, 0
        %v441 = vsel %vm433, %v418, 0
        %v444 = vsel %vm433, %v419, 0
        %v447 = vsel %vm433, %v420, 0
        %v450 = vsel %vm433, %v421, 0
        %v453 = vsel %vm433, %v422, 0
        %v456 = vsel %vm433, %v423, 0
        %vm458 = vcmask 1041408
        %v460 = vsel %vm458, %v431, 0
        %v463 = vsel %vm458, %v432, 0
        %465 = vmatprep.subr.bf16.mxu0 %v463
        %466 = vmatpush1.bf16.msra.mxu0 %v460
        %467 = vmatprep.subr.bf16.mxu0 0
        %468 = vmatpush1.bf16.msra.mxu0 0
        %469 = vmatprep.subr.bf16.mxu0 0
        %470 = vmatpush1.bf16.msra.mxu0 0
        %471 = vmatprep.subr.bf16.mxu0 0
        %472 = vmatpush1.bf16.msra.mxu0 0
        %473 = vmatprep.subr.bf16.mxu0 0
        %474 = vmatpush1.bf16.msra.mxu0 0
        %475 = vmatprep.subr.bf16.mxu0 0
        %476 = vmatpush1.bf16.msra.mxu0 0
        %477 = vmatprep.subr.bf16.mxu0 0
        %478 = vmatpush1.bf16.msra.mxu0 0
        %479 = vmatprep.subr.bf16.mxu0 0
        %480 = vmatpush1.bf16.msra.mxu0 0
        %481 = vmatprep.subr.bf16.mxu0 0
        %482 = vmatpush1.bf16.msra.mxu0 0
        %483 = vmatprep.subr.bf16.mxu0 0
        %484 = vmatpush1.bf16.msra.mxu0 0
        %485 = vmatprep.subr.bf16.mxu0 0
        %486 = vmatpush1.bf16.msra.mxu0 0
        %487 = vmatprep.subr.bf16.mxu0 0
        %488 = vmatpush1.bf16.msra.mxu0 0
        %489 = vmatprep.subr.bf16.mxu0 0
        %490 = vmatpush1.bf16.msra.mxu0 0
        %491 = vmatprep.subr.bf16.mxu0 0
        %492 = vmatpush1.bf16.msra.mxu0 0
        %493 = vmatprep.subr.bf16.mxu0 0
        %494 = vmatpush1.bf16.msra.mxu0 0
        %495 = vmatprep.subr.bf16.mxu0 0
        %496 = vmatpush1.bf16.msra.mxu0 0
        %497 = vmatprep.mubr.bf16.mxu0 0
        %498 = vmatmul.mubr.bf16.gmra.mrb[0].mxu0 %v435
        %v499 = vpop.f32.mrb[0].mxu0
        %v500 = vadd.f32 %v307, %v499
        %v501 = vpop.f32.mrb[0].mxu0
        %v502 = vadd.f32 %v307, %v501
        %v503 = vpop.f32.mrb[0].mxu0
        %v504 = vadd.f32 %v312, %v503
        %v505 = vpop.f32.mrb[0].mxu0
        %v506 = vadd.f32 %v312, %v505
        %507 = vmatprep.mubr.bf16.mxu0 0
        %508 = vmatmul.mubr.bf16.gmra.mrb[0].mxu0 %v438
        %v509 = vpop.f32.mrb[0].mxu0
        %v510 = vadd.f32 %v317, %v509
        %v511 = vpop.f32.mrb[0].mxu0
        %v512 = vadd.f32 %v317, %v511
        %v513 = vpop.f32.mrb[0].mxu0
        %v514 = vadd.f32 %v322, %v513
        %v515 = vpop.f32.mrb[0].mxu0
        %v516 = vadd.f32 %v322, %v515
        %517 = vmatprep.mubr.bf16.mxu0 0
        %518 = vmatmul.mubr.bf16.gmra.mrb[0].mxu0 %v441
        %v519 = vpop.f32.mrb[0].mxu0
        %v520 = vadd.f32 %v327, %v519
        %v521 = vpop.f32.mrb[0].mxu0
        %v522 = vadd.f32 %v327, %v521
        %v523 = vpop.f32.mrb[0].mxu0
        %v524 = vadd.f32 %v332, %v523
        %v525 = vpop.f32.mrb[0].mxu0
        %v526 = vadd.f32 %v332, %v525
        %527 = vmatprep.mubr.bf16.mxu0 0
        %528 = vmatmul.mubr.bf16.gmra.mrb[0].mxu0 %v444
        %v529 = vpop.f32.mrb[0].mxu0
        %v530 = vadd.f32 %v337, %v529
        %v531 = vpop.f32.mrb[0].mxu0
        %v532 = vadd.f32 %v337, %v531
        %v533 = vpop.f32.mrb[0].mxu0
        %v534 = vadd.f32 %v342, %v533
        %v535 = vpop.f32.mrb[0].mxu0
        %v536 = vadd.f32 %v342, %v535
        %537 = vmatprep.mubr.bf16.mxu0 0
        %538 = vmatmul.mubr.bf16.gmra.mrb[0].mxu0 %v447
        %v539 = vpop.f32.mrb[0].mxu0
        %v540 = vadd.f32 %v347, %v539
        %v541 = vpop.f32.mrb[0].mxu0
        %v542 = vadd.f32 %v347, %v541
        %v543 = vpop.f32.mrb[0].mxu0
        %v544 = vadd.f32 %v352, %v543
        %v545 = vpop.f32.mrb[0].mxu0
        %v546 = vadd.f32 %v352, %v545
        %547 = vmatprep.mubr.bf16.mxu0 0
        %548 = vmatmul.mubr.bf16.gmra.mrb[0].mxu0 %v450
        %v549 = vpop.f32.mrb[0].mxu0
        %v550 = vadd.f32 %v357, %v549
        %v551 = vpop.f32.mrb[0].mxu0
        %v552 = vadd.f32 %v357, %v551
        %v553 = vpop.f32.mrb[0].mxu0
        %v554 = vadd.f32 %v362, %v553
        %v555 = vpop.f32.mrb[0].mxu0
        %v556 = vadd.f32 %v362, %v555
        %557 = vmatprep.mubr.bf16.mxu0 0
        %558 = vmatmul.mubr.bf16.gmra.mrb[0].mxu0 %v453
        %v559 = vpop.f32.mrb[0].mxu0
        %v560 = vadd.f32 %v367, %v559
        %v561 = vpop.f32.mrb[0].mxu0
        %v562 = vadd.f32 %v367, %v561
        %v563 = vpop.f32.mrb[0].mxu0
        %v564 = vadd.f32 %v372, %v563
        %v565 = vpop.f32.mrb[0].mxu0
        %v566 = vadd.f32 %v372, %v565
        %567 = vmatprep.mubr.bf16.mxu0 0
        %568 = vmatmul.mubr.bf16.gmra.mrb[0].mxu0 %v456
        %v569 = vpop.f32.mrb[0].mxu0
        %v570 = vadd.f32 %v377, %v569
        %v571 = vpop.f32.mrb[0].mxu0
        %v572 = vadd.f32 %v377, %v571
        %v573 = vpop.f32.mrb[0].mxu0
        %v574 = vadd.f32 %v382, %v573
        %v575 = vpop.f32.mrb[0].mxu0
        %v576 = vadd.f32 %v382, %v575
        %577 = vdwg.mxu0
        %v578 = vxor.u32 %v500, 2147483648
        %v579 = vxor.u32 %v502, 2147483648
        %v580 = vxor.u32 %v504, 2147483648
        %v581 = vxor.u32 %v506, 2147483648
        %v582 = vxor.u32 %v510, 2147483648
        %v583 = vxor.u32 %v512, 2147483648
        %v584 = vxor.u32 %v514, 2147483648
        %v585 = vxor.u32 %v516, 2147483648
        %v586 = vxor.u32 %v520, 2147483648
        %v587 = vxor.u32 %v522, 2147483648
        %v588 = vxor.u32 %v524, 2147483648
        %v589 = vxor.u32 %v526, 2147483648
        %v590 = vxor.u32 %v530, 2147483648
        %v591 = vxor.u32 %v532, 2147483648
        %v592 = vxor.u32 %v534, 2147483648
        %v593 = vxor.u32 %v536, 2147483648
        %v594 = vxor.u32 %v540, 2147483648
        %v595 = vxor.u32 %v542, 2147483648
        %v596 = vxor.u32 %v544, 2147483648
        %v597 = vxor.u32 %v546, 2147483648
        %v598 = vxor.u32 %v550, 2147483648
        %v599 = vxor.u32 %v552, 2147483648
        %v600 = vxor.u32 %v554, 2147483648
        %v601 = vxor.u32 %v556, 2147483648
        %v602 = vxor.u32 %v560, 2147483648
        %v603 = vxor.u32 %v562, 2147483648
        %v604 = vxor.u32 %v564, 2147483648
        %v605 = vxor.u32 %v566, 2147483648
        %v606 = vxor.u32 %v570, 2147483648
        %v607 = vxor.u32 %v572, 2147483648
        %v608 = vxor.u32 %v574, 2147483648
        %v609 = vxor.u32 %v576, 2147483648
        %v610 = vmul.f32 %v578, 1.442695
        %v611 = vpow.pop %v610
        %v612 = vmul.f32 %v579, 1.442695
        %v613 = vpow.pop %v612
        %v614 = vmul.f32 %v580, 1.442695
        %v615 = vpow.pop %v614
        %v616 = vmul.f32 %v581, 1.442695
        %v617 = vpow.pop %v616
        %v618 = vmul.f32 %v582, 1.442695
        %v619 = vpow.pop %v618
        %v620 = vmul.f32 %v583, 1.442695
        %v621 = vpow.pop %v620
        %v622 = vmul.f32 %v584, 1.442695
        %v623 = vpow.pop %v622
        %v624 = vmul.f32 %v585, 1.442695
        %v625 = vpow.pop %v624
        %v626 = vmul.f32 %v586, 1.442695
        %v627 = vpow.pop %v626
        %v628 = vmul.f32 %v587, 1.442695
        %v629 = vpow.pop %v628
        %v630 = vmul.f32 %v588, 1.442695
        %v631 = vpow.pop %v630
        %v632 = vmul.f32 %v589, 1.442695
        %v633 = vpow.pop %v632
        %v634 = vmul.f32 %v590, 1.442695
        %v635 = vpow.pop %v634
        %v636 = vmul.f32 %v591, 1.442695
        %v637 = vpow.pop %v636
        %v638 = vmul.f32 %v592, 1.442695
        %v639 = vpow.pop %v638
        %v640 = vmul.f32 %v593, 1.442695
        %v641 = vpow.pop %v640
        %v642 = vmul.f32 %v594, 1.442695
        %v643 = vpow.pop %v642
        %v644 = vmul.f32 %v595, 1.442695
        %v645 = vpow.pop %v644
        %v646 = vmul.f32 %v596, 1.442695
        %v647 = vpow.pop %v646
        %v648 = vmul.f32 %v597, 1.442695
        %v649 = vpow.pop %v648
        %v650 = vmul.f32 %v598, 1.442695
        %v651 = vpow.pop %v650
        %v652 = vmul.f32 %v599, 1.442695
        %v653 = vpow.pop %v652
        %v654 = vmul.f32 %v600, 1.442695
        %v655 = vpow.pop %v654
        %v656 = vmul.f32 %v601, 1.442695
        %v657 = vpow.pop %v656
        %v658 = vmul.f32 %v602, 1.442695
        %v659 = vpow.pop %v658
        %v660 = vmul.f32 %v603, 1.442695
        %v661 = vpow.pop %v660
        %v662 = vmul.f32 %v604, 1.442695
        %v663 = vpow.pop %v662
        %v664 = vmul.f32 %v605, 1.442695
        %v665 = vpow.pop %v664
        %v666 = vmul.f32 %v606, 1.442695
        %v667 = vpow.pop %v666
        %v668 = vmul.f32 %v607, 1.442695
        %v669 = vpow.pop %v668
        %v670 = vmul.f32 %v608, 1.442695
        %v671 = vpow.pop %v670
        %v672 = vmul.f32 %v609, 1.442695
        %v673 = vpow.pop %v672
        %v674 = vadd.f32 %v611, 1.0
        %v675 = vadd.f32 %v613, 1.0
        %v676 = vadd.f32 %v615, 1.0
        %v677 = vadd.f32 %v617, 1.0
        %v678 = vadd.f32 %v619, 1.0
        %v679 = vadd.f32 %v621, 1.0
        %v680 = vadd.f32 %v623, 1.0
        %v681 = vadd.f32 %v625, 1.0
        %v682 = vadd.f32 %v627, 1.0
        %v683 = vadd.f32 %v629, 1.0
        %v684 = vadd.f32 %v631, 1.0
        %v685 = vadd.f32 %v633, 1.0
        %v686 = vadd.f32 %v635, 1.0
        %v687 = vadd.f32 %v637, 1.0
        %v688 = vadd.f32 %v639, 1.0
        %v689 = vadd.f32 %v641, 1.0
        %v690 = vadd.f32 %v643, 1.0
        %v691 = vadd.f32 %v645, 1.0
        %v692 = vadd.f32 %v647, 1.0
        %v693 = vadd.f32 %v649, 1.0
        %v694 = vadd.f32 %v651, 1.0
        %v695 = vadd.f32 %v653, 1.0
        %v696 = vadd.f32 %v655, 1.0
        %v697 = vadd.f32 %v657, 1.0
        %v698 = vadd.f32 %v659, 1.0
        %v699 = vadd.f32 %v661, 1.0
        %v700 = vadd.f32 %v663, 1.0
        %v701 = vadd.f32 %v665, 1.0
        %v702 = vadd.f32 %v667, 1.0
        %v703 = vadd.f32 %v669, 1.0
        %v704 = vadd.f32 %v671, 1.0
        %v705 = vadd.f32 %v673, 1.0
        %v706 = vrcp.pop %v674
        %v707 = vmul.f32 1.0, %v706
        %v708 = vrcp.pop %v675
        %v709 = vmul.f32 1.0, %v708
        %v710 = vrcp.pop %v676
        %v711 = vmul.f32 1.0, %v710
        %v712 = vrcp.pop %v677
        %v713 = vmul.f32 1.0, %v712
        %v714 = vrcp.pop %v678
        %v715 = vmul.f32 1.0, %v714
        %v716 = vrcp.pop %v679
        %v717 = vmul.f32 1.0, %v716
        %v718 = vrcp.pop %v680
        %v719 = vmul.f32 1.0, %v718
        %v720 = vrcp.pop %v681
        %v721 = vmul.f32 1.0, %v720
        %v722 = vrcp.pop %v682
        %v723 = vmul.f32 1.0, %v722
        %v724 = vrcp.pop %v683
        %v725 = vmul.f32 1.0, %v724
        %v726 = vrcp.pop %v684
        %v727 = vmul.f32 1.0, %v726
        %v728 = vrcp.pop %v685
        %v729 = vmul.f32 1.0, %v728
        %v730 = vrcp.pop %v686
        %v731 = vmul.f32 1.0, %v730
        %v732 = vrcp.pop %v687
        %v733 = vmul.f32 1.0, %v732
        %v734 = vrcp.pop %v688
        %v735 = vmul.f32 1.0, %v734
        %v736 = vrcp.pop %v689
        %v737 = vmul.f32 1.0, %v736
        %v738 = vrcp.pop %v690
        %v739 = vmul.f32 1.0, %v738
        %v740 = vrcp.pop %v691
        %v741 = vmul.f32 1.0, %v740
        %v742 = vrcp.pop %v692
        %v743 = vmul.f32 1.0, %v742
        %v744 = vrcp.pop %v693
        %v745 = vmul.f32 1.0, %v744
        %v746 = vrcp.pop %v694
        %v747 = vmul.f32 1.0, %v746
        %v748 = vrcp.pop %v695
        %v749 = vmul.f32 1.0, %v748
        %v750 = vrcp.pop %v696
        %v751 = vmul.f32 1.0, %v750
        %v752 = vrcp.pop %v697
        %v753 = vmul.f32 1.0, %v752
        %v754 = vrcp.pop %v698
        %v755 = vmul.f32 1.0, %v754
        %v756 = vrcp.pop %v699
        %v757 = vmul.f32 1.0, %v756
        %v758 = vrcp.pop %v700
        %v759 = vmul.f32 1.0, %v758
        %v760 = vrcp.pop %v701
        %v761 = vmul.f32 1.0, %v760
        %v762 = vrcp.pop %v702
        %v763 = vmul.f32 1.0, %v762
        %v764 = vrcp.pop %v703
        %v765 = vmul.f32 1.0, %v764
        %v766 = vrcp.pop %v704
        %v767 = vmul.f32 1.0, %v766
        %v768 = vrcp.pop %v705
        %v769 = vmul.f32 1.0, %v768
        %v770 = vmul.f32 %v500, %v707
        %v771 = vmul.f32 %v502, %v709
        %v772 = vmul.f32 %v504, %v711
        %v773 = vmul.f32 %v506, %v713
        %v774 = vmul.f32 %v510, %v715
        %v775 = vmul.f32 %v512, %v717
        %v776 = vmul.f32 %v514, %v719
        %v777 = vmul.f32 %v516, %v721
        %v778 = vmul.f32 %v520, %v723
        %v779 = vmul.f32 %v522, %v725
        %v780 = vmul.f32 %v524, %v727
        %v781 = vmul.f32 %v526, %v729
        %v782 = vmul.f32 %v530, %v731
        %v783 = vmul.f32 %v532, %v733
        %v784 = vmul.f32 %v534, %v735
        %v785 = vmul.f32 %v536, %v737
        %v786 = vmul.f32 %v540, %v739
        %v787 = vmul.f32 %v542, %v741
        %v788 = vmul.f32 %v544, %v743
        %v789 = vmul.f32 %v546, %v745
        %v790 = vmul.f32 %v550, %v747
        %v791 = vmul.f32 %v552, %v749
        %v792 = vmul.f32 %v554, %v751
        %v793 = vmul.f32 %v556, %v753
        %v794 = vmul.f32 %v560, %v755
        %v795 = vmul.f32 %v562, %v757
        %v796 = vmul.f32 %v564, %v759
        %v797 = vmul.f32 %v566, %v761
        %v798 = vmul.f32 %v570, %v763
        %v799 = vmul.f32 %v572, %v765
        %v800 = vmul.f32 %v574, %v767
        %v801 = vmul.f32 %v576, %v769
        %v802 = vld [vmem:[#allocation2] sm:$0xff]
        %v803 = vld [vmem:[#allocation2 + $0x8] sm:$0xff]
        %v804 = vld [vmem:[#allocation2 + $0x10] sm:$0xff]
        %v805 = vld [vmem:[#allocation2 + $0x18] sm:$0xff]
        %v806 = vld [vmem:[#allocation2 + $0x20] sm:$0xff]
        %v807 = vld [vmem:[#allocation2 + $0x28] sm:$0xff]
        %v808 = vld [vmem:[#allocation2 + $0x30] sm:$0xff]
        %v809 = vld [vmem:[#allocation2 + $0x38] sm:$0xff]
        %v810 = vld [vmem:[#allocation2 + $0x40] sm:$0xff]
        %v811 = vld [vmem:[#allocation2 + $0x48] sm:$0xff]
        %v812 = vld [vmem:[#allocation2 + $0x50] sm:$0xff]
        %v813 = vld [vmem:[#allocation2 + $0x58] sm:$0xff]
        %v814 = vld [vmem:[#allocation2 + $0x60] sm:$0xff]
        %v815 = vld [vmem:[#allocation2 + $0x68] sm:$0xff]
        %v816 = vld [vmem:[#allocation2 + $0x70] sm:$0xff]
        %v817 = vld [vmem:[#allocation2 + $0x78] sm:$0xff]
        %v818 = vadd.f32 %v802, %v770
        %v819 = vadd.f32 %v803, %v772
        %v820 = vadd.f32 %v804, %v774
        %v821 = vadd.f32 %v805, %v776
        %v822 = vadd.f32 %v806, %v778
        %v823 = vadd.f32 %v807, %v780
        %v824 = vadd.f32 %v808, %v782
        %v825 = vadd.f32 %v809, %v784
        %v826 = vadd.f32 %v810, %v786
        %v827 = vadd.f32 %v811, %v788
        %v828 = vadd.f32 %v812, %v790
        %v829 = vadd.f32 %v813, %v792
        %v830 = vadd.f32 %v814, %v794
        %v831 = vadd.f32 %v815, %v796
        %v832 = vadd.f32 %v816, %v798
        %v833 = vadd.f32 %v817, %v800
        %834 = vst [vmem:[#allocation2] sm:$0xff] %v818
        %835 = vst [vmem:[#allocation2 + $0x8] sm:$0xff] %v819
        %836 = vst [vmem:[#allocation2 + $0x10] sm:$0xff] %v820
        %837 = vst [vmem:[#allocation2 + $0x18] sm:$0xff] %v821
        %838 = vst [vmem:[#allocation2 + $0x20] sm:$0xff] %v822
        %839 = vst [vmem:[#allocation2 + $0x28] sm:$0xff] %v823
        %840 = vst [vmem:[#allocation2 + $0x30] sm:$0xff] %v824
        %841 = vst [vmem:[#allocation2 + $0x38] sm:$0xff] %v825
        %842 = vst [vmem:[#allocation2 + $0x40] sm:$0xff] %v826
        %843 = vst [vmem:[#allocation2 + $0x48] sm:$0xff] %v827
        %844 = vst [vmem:[#allocation2 + $0x50] sm:$0xff] %v828
        %845 = vst [vmem:[#allocation2 + $0x58] sm:$0xff] %v829
        %846 = vst [vmem:[#allocation2 + $0x60] sm:$0xff] %v830
        %847 = vst [vmem:[#allocation2 + $0x68] sm:$0xff] %v831
        %848 = vst [vmem:[#allocation2 + $0x70] sm:$0xff] %v832
        %849 = vst [vmem:[#allocation2 + $0x78] sm:$0xff] %v833
        %v850 = vld [vmem:[#allocation2] sm:$0xff]
        %v851 = vld [vmem:[#allocation2 + $0x8] sm:$0xff]
        %v852 = vld [vmem:[#allocation2 + $0x10] sm:$0xff]
        %v853 = vld [vmem:[#allocation2 + $0x18] sm:$0xff]
        %v854 = vld [vmem:[#allocation2 + $0x20] sm:$0xff]
        %v855 = vld [vmem:[#allocation2 + $0x28] sm:$0xff]
        %v856 = vld [vmem:[#allocation2 + $0x30] sm:$0xff]
        %v857 = vld [vmem:[#allocation2 + $0x38] sm:$0xff]
        %v858 = vld [vmem:[#allocation2 + $0x40] sm:$0xff]
        %v859 = vld [vmem:[#allocation2 + $0x48] sm:$0xff]
        %v860 = vld [vmem:[#allocation2 + $0x50] sm:$0xff]
        %v861 = vld [vmem:[#allocation2 + $0x58] sm:$0xff]
        %v862 = vld [vmem:[#allocation2 + $0x60] sm:$0xff]
        %v863 = vld [vmem:[#allocation2 + $0x68] sm:$0xff]
        %v864 = vld [vmem:[#allocation2 + $0x70] sm:$0xff]
        %v865 = vld [vmem:[#allocation2 + $0x78] sm:$0xff]
        %v866 = vadd.f32 %v850, %v771
        %v867 = vadd.f32 %v851, %v773
        %v868 = vadd.f32 %v852, %v775
        %v869 = vadd.f32 %v853, %v777
        %v870 = vadd.f32 %v854, %v779
        %v871 = vadd.f32 %v855, %v781
        %v872 = vadd.f32 %v856, %v783
        %v873 = vadd.f32 %v857, %v785
        %v874 = vadd.f32 %v858, %v787
        %v875 = vadd.f32 %v859, %v789
        %v876 = vadd.f32 %v860, %v791
        %v877 = vadd.f32 %v861, %v793
        %v878 = vadd.f32 %v862, %v795
        %v879 = vadd.f32 %v863, %v797
        %v880 = vadd.f32 %v864, %v799
        %v881 = vadd.f32 %v865, %v801
        %882 = vst [vmem:[#allocation2] sm:$0xff] %v866
        %883 = vst [vmem:[#allocation2 + $0x8] sm:$0xff] %v867
        %884 = vst [vmem:[#allocation2 + $0x10] sm:$0xff] %v868
        %885 = vst [vmem:[#allocation2 + $0x18] sm:$0xff] %v869
        %886 = vst [vmem:[#allocation2 + $0x20] sm:$0xff] %v870
        %887 = vst [vmem:[#allocation2 + $0x28] sm:$0xff] %v871
        %888 = vst [vmem:[#allocation2 + $0x30] sm:$0xff] %v872
        %889 = vst [vmem:[#allocation2 + $0x38] sm:$0xff] %v873
        %890 = vst [vmem:[#allocation2 + $0x40] sm:$0xff] %v874
        %891 = vst [vmem:[#allocation2 + $0x48] sm:$0xff] %v875
        %892 = vst [vmem:[#allocation2 + $0x50] sm:$0xff] %v876
        %893 = vst [vmem:[#allocation2 + $0x58] sm:$0xff] %v877
        %894 = vst [vmem:[#allocation2 + $0x60] sm:$0xff] %v878
        %895 = vst [vmem:[#allocation2 + $0x68] sm:$0xff] %v879
        %896 = vst [vmem:[#allocation2 + $0x70] sm:$0xff] %v880
        %897 = vst [vmem:[#allocation2 + $0x78] sm:$0xff] %v881
        // Predicated region
        $region45: #{tpu_custom_call.1} parent=39 // pred_check
          %p898 = pneg %p251
        $region46: #{tpu_custom_call.1} parent=39 // pred_check_branch
          %900 = sbr.rel (%p898) target = $region48
        $region47: #{tpu_custom_call.1} parent=39 // pred_region
          %v901 = vld [vmem:[#allocation2] sm:$0xff]
          %v902 = vld [vmem:[#allocation2 + $0x8] sm:$0xff]
          %v903 = vld [vmem:[#allocation2 + $0x10] sm:$0xff]
          %v904 = vld [vmem:[#allocation2 + $0x18] sm:$0xff]
          %v905 = vld [vmem:[#allocation2 + $0x20] sm:$0xff]
          %v906 = vld [vmem:[#allocation2 + $0x28] sm:$0xff]
          %v907 = vld [vmem:[#allocation2 + $0x30] sm:$0xff]
          %v908 = vld [vmem:[#allocation2 + $0x38] sm:$0xff]
          %v909 = vld [vmem:[#allocation2 + $0x40] sm:$0xff]
          %v910 = vld [vmem:[#allocation2 + $0x48] sm:$0xff]
          %v911 = vld [vmem:[#allocation2 + $0x50] sm:$0xff]
          %v912 = vld [vmem:[#allocation2 + $0x58] sm:$0xff]
          %v913 = vld [vmem:[#allocation2 + $0x60] sm:$0xff]
          %v914 = vld [vmem:[#allocation2 + $0x68] sm:$0xff]
          %v915 = vld [vmem:[#allocation2 + $0x70] sm:$0xff]
          %v916 = vld [vmem:[#allocation2 + $0x78] sm:$0xff]
          %917 = vxpose.xlu0.b32.start [1/16] %v901, 128
          %918 = vxpose.xlu0.b32.cont [2/16] %v902, 128
          %919 = vxpose.xlu0.b32.cont [3/16] %v903, 128
          %920 = vxpose.xlu0.b32.cont [4/16] %v904, 128
          %921 = vxpose.xlu0.b32.cont [5/16] %v905, 128
          %922 = vxpose.xlu0.b32.cont [6/16] %v906, 128
          %923 = vxpose.xlu0.b32.cont [7/16] %v907, 128
          %924 = vxpose.xlu0.b32.cont [8/16] %v908, 128
          %925 = vxpose.xlu0.b32.cont [9/16] %v909, 128
          %926 = vxpose.xlu0.b32.cont [10/16] %v910, 128
          %927 = vxpose.xlu0.b32.cont [11/16] %v911, 128
          %928 = vxpose.xlu0.b32.cont [12/16] %v912, 128
          %929 = vxpose.xlu0.b32.cont [13/16] %v913, 128
          %930 = vxpose.xlu0.b32.cont [14/16] %v914, 128
          %931 = vxpose.xlu0.b32.cont [15/16] %v915, 128
          %932 = vxpose.xlu0.b32.end [16/16] %v916, 128
          %v933 = vpop.trf.xlu0
          %v934 = vpop.trf.xlu0
          %v935 = vpop.trf.xlu0
          %v936 = vpop.trf.xlu0
          %v937 = vpop.trf.xlu0
          %v938 = vpop.trf.xlu0
          %v939 = vpop.trf.xlu0
          %v940 = vpop.trf.xlu0
          %v941 = vpop.trf.xlu0
          %v942 = vpop.trf.xlu0
          %v943 = vpop.trf.xlu0
          %v944 = vpop.trf.xlu0
          %v945 = vpop.trf.xlu0
          %v946 = vpop.trf.xlu0
          %v947 = vpop.trf.xlu0
          %v948 = vpop.trf.xlu0
          %v949 = vpack.c.bf16 %v934, %v933
          %v950 = vpack.c.bf16 %v936, %v935
          %v951 = vpack.c.bf16 %v938, %v937
          %v952 = vpack.c.bf16 %v940, %v939
          %v953 = vpack.c.bf16 %v942, %v941
          %v954 = vpack.c.bf16 %v944, %v943
          %v955 = vpack.c.bf16 %v946, %v945
          %v956 = vpack.c.bf16 %v948, %v947
          %v957 = vld [vmem:[%s3] sm:$0xf]
          %v958 = vld [vmem:[%s3 + $0x4] sm:$0xf]
          %v959 = vld [vmem:[%s3 + $0x8] sm:$0xf]
          %v960 = vld [vmem:[%s3 + $0xc] sm:$0xf]
          %v961 = vld [vmem:[%s3 + $0x10] sm:$0xf]
          %v962 = vld [vmem:[%s3 + $0x14] sm:$0xf]
          %v963 = vld [vmem:[%s3 + $0x18] sm:$0xf]
          %v964 = vld [vmem:[%s3 + $0x1c] sm:$0xf]
          %v965 = vld [vmem:[%s3 + $0x20] sm:$0xf]
          %v966 = vld [vmem:[%s3 + $0x24] sm:$0xf]
          %v967 = vld [vmem:[%s3 + $0x28] sm:$0xf]
          %v968 = vld [vmem:[%s3 + $0x2c] sm:$0xf]
          %v969 = vld [vmem:[%s3 + $0x30] sm:$0xf]
          %v970 = vld [vmem:[%s3 + $0x34] sm:$0xf]
          %v971 = vld [vmem:[%s3 + $0x38] sm:$0xf]
          %v972 = vld [vmem:[%s3 + $0x3c] sm:$0xf]
          %v989 = vunpack.c.l.b16 %v957
          %v990 = vunpack.c.l.b16 %v958
          %v991 = vunpack.c.l.b16 %v959
          %v992 = vunpack.c.l.b16 %v960
          %v993 = vunpack.c.l.b16 %v961
          %v994 = vunpack.c.l.b16 %v962
          %v995 = vunpack.c.l.b16 %v963
          %v996 = vunpack.c.l.b16 %v964
          %v997 = vunpack.c.l.b16 %v965
          %v998 = vunpack.c.l.b16 %v966
          %v999 = vunpack.c.l.b16 %v967
          %v1000 = vunpack.c.l.b16 %v968
          %v1001 = vunpack.c.l.b16 %v969
          %v1002 = vunpack.c.l.b16 %v970
          %v1003 = vunpack.c.l.b16 %v971
          %v1004 = vunpack.c.l.b16 %v972
          %v1005 = vpack.c.b16 %v990, %v989
          %v1006 = vpack.c.b16 %v992, %v991
          %v1007 = vpack.c.b16 %v994, %v993
          %v1008 = vpack.c.b16 %v996, %v995
          %v1009 = vpack.c.b16 %v998, %v997
          %v1010 = vpack.c.b16 %v1000, %v999
          %v1011 = vpack.c.b16 %v1002, %v1001
          %v1012 = vpack.c.b16 %v1004, %v1003
          %1021 = vmatprep.subr.bf16.mxu0 0
          %1022 = vmatpush1.bf16.msra.mxu0 %v1005
          %1023 = vmatprep.subr.bf16.mxu0 0
          %1024 = vmatpush1.bf16.msra.mxu0 %v1006
          %1025 = vmatprep.subr.bf16.mxu0 0
          %1026 = vmatpush1.bf16.msra.mxu0 %v1007
          %1027 = vmatprep.subr.bf16.mxu0 0
          %1028 = vmatpush1.bf16.msra.mxu0 %v1008
          %1029 = vmatprep.subr.bf16.mxu0 0
          %1030 = vmatpush1.bf16.msra.mxu0 %v1009
          %1031 = vmatprep.subr.bf16.mxu0 0
          %1032 = vmatpush1.bf16.msra.mxu0 %v1010
          %1033 = vmatprep.subr.bf16.mxu0 0
          %1034 = vmatpush1.bf16.msra.mxu0 %v1011
          %1035 = vmatprep.subr.bf16.mxu0 0
          %1036 = vmatpush1.bf16.msra.mxu0 %v1012
          %1037 = vmatprep.subr.bf16.mxu0 0
          %1038 = vmatpush1.bf16.msra.mxu0 0
          %1039 = vmatprep.subr.bf16.mxu0 0
          %1040 = vmatpush1.bf16.msra.mxu0 0
          %1041 = vmatprep.subr.bf16.mxu0 0
          %1042 = vmatpush1.bf16.msra.mxu0 0
          %1043 = vmatprep.subr.bf16.mxu0 0
          %1044 = vmatpush1.bf16.msra.mxu0 0
          %1045 = vmatprep.subr.bf16.mxu0 0
          %1046 = vmatpush1.bf16.msra.mxu0 0
          %1047 = vmatprep.subr.bf16.mxu0 0
          %1048 = vmatpush1.bf16.msra.mxu0 0
          %1049 = vmatprep.subr.bf16.mxu0 0
          %1050 = vmatpush1.bf16.msra.mxu0 0
          %1051 = vmatprep.subr.bf16.mxu0 0
          %1052 = vmatpush1.bf16.msra.mxu0 0
          %1053 = vmatprep.mubr.bf16.mxu0 0
          %1054 = vmatmul.mubr.bf16.gmra.mrb[0].mxu0 %v949
          %v1055 = vpop.f32.mrb[0].mxu0
          %v1056 = vadd.f32 0.0, %v1055
          %v1057 = vpop.f32.mrb[0].mxu0
          %v1058 = vpop.f32.mrb[0].mxu0
          %v1059 = vadd.f32 0.0, %v1058
          %v1060 = vpop.f32.mrb[0].mxu0
          %1061 = vmatprep.mubr.bf16.mxu0 0
          %1062 = vmatmul.mubr.bf16.gmra.mrb[0].mxu0 %v950
          %v1063 = vpop.f32.mrb[0].mxu0
          %v1064 = vadd.f32 0.0, %v1063
          %v1065 = vpop.f32.mrb[0].mxu0
          %v1066 = vpop.f32.mrb[0].mxu0
          %v1067 = vadd.f32 0.0, %v1066
          %v1068 = vpop.f32.mrb[0].mxu0
          %1069 = vmatprep.mubr.bf16.mxu0 0
          %1070 = vmatmul.mubr.bf16.gmra.mrb[0].mxu0 %v951
          %v1071 = vpop.f32.mrb[0].mxu0
          %v1072 = vadd.f32 0.0, %v1071
          %v1073 = vpop.f32.mrb[0].mxu0
          %v1074 = vpop.f32.mrb[0].mxu0
          %v1075 = vadd.f32 0.0, %v1074
          %v1076 = vpop.f32.mrb[0].mxu0
          %1077 = vmatprep.mubr.bf16.mxu0 0
          %1078 = vmatmul.mubr.bf16.gmra.mrb[0].mxu0 %v952
          %v1079 = vpop.f32.mrb[0].mxu0
          %v1080 = vadd.f32 0.0, %v1079
          %v1081 = vpop.f32.mrb[0].mxu0
          %v1082 = vpop.f32.mrb[0].mxu0
          %v1083 = vadd.f32 0.0, %v1082
          %v1084 = vpop.f32.mrb[0].mxu0
          %1085 = vmatprep.mubr.bf16.mxu0 0
          %1086 = vmatmul.mubr.bf16.gmra.mrb[0].mxu0 %v953
          %v1087 = vpop.f32.mrb[0].mxu0
          %v1088 = vadd.f32 0.0, %v1087
          %v1089 = vpop.f32.mrb[0].mxu0
          %v1090 = vpop.f32.mrb[0].mxu0
          %v1091 = vadd.f32 0.0, %v1090
          %v1092 = vpop.f32.mrb[0].mxu0
          %1093 = vmatprep.mubr.bf16.mxu0 0
          %1094 = vmatmul.mubr.bf16.gmra.mrb[0].mxu0 %v954
          %v1095 = vpop.f32.mrb[0].mxu0
          %v1096 = vadd.f32 0.0, %v1095
          %v1097 = vpop.f32.mrb[0].mxu0
          %v1098 = vpop.f32.mrb[0].mxu0
          %v1099 = vadd.f32 0.0, %v1098
          %v1100 = vpop.f32.mrb[0].mxu0
          %1101 = vmatprep.mubr.bf16.mxu0 0
          %1102 = vmatmul.mubr.bf16.gmra.mrb[0].mxu0 %v955
          %v1103 = vpop.f32.mrb[0].mxu0
          %v1104 = vadd.f32 0.0, %v1103
          %v1105 = vpop.f32.mrb[0].mxu0
          %v1106 = vpop.f32.mrb[0].mxu0
          %v1107 = vadd.f32 0.0, %v1106
          %v1108 = vpop.f32.mrb[0].mxu0
          %1109 = vmatprep.mubr.bf16.mxu0 0
          %1110 = vmatmul.mubr.bf16.gmra.mrb[0].mxu0 %v956
          %v1111 = vpop.f32.mrb[0].mxu0
          %v1112 = vadd.f32 0.0, %v1111
          %v1113 = vpop.f32.mrb[0].mxu0
          %v1114 = vpop.f32.mrb[0].mxu0
          %v1115 = vadd.f32 0.0, %v1114
          %v1116 = vpop.f32.mrb[0].mxu0
          %1117 = vdwg.mxu0
          %v1118 = vadd.f32 %v1056, %v1059
          %v1119 = vadd.f32 %v1118, %v1064
          %v1120 = vadd.f32 %v1119, %v1067
          %v1121 = vadd.f32 %v1120, %v1072
          %v1122 = vadd.f32 %v1121, %v1075
          %v1123 = vadd.f32 %v1122, %v1080
          %v1124 = vadd.f32 %v1123, %v1083
          %v1125 = vadd.f32 %v1124, %v1088
          %v1126 = vadd.f32 %v1125, %v1091
          %v1127 = vadd.f32 %v1126, %v1096
          %v1128 = vadd.f32 %v1127, %v1099
          %v1129 = vadd.f32 %v1128, %v1104
          %v1130 = vadd.f32 %v1129, %v1107
          %v1131 = vadd.f32 %v1130, %v1112
          %v1132 = vadd.f32 %v1131, %v1115
          %v1133 = vrot.slane %v1132, 4
          %v1134 = vadd.f32 %v1132, %v1133
          %v1135 = vrot.slane %v1134, 2
          %v1136 = vadd.f32 %v1134, %v1135
          %v1137 = vrot.slane %v1136, 1
          %v1138 = vadd.f32 %v1136, %v1137
          %v1139 = vld [vmem:[%s4] sm:$0x1]
          %v1140 = vadd.f32 %v1138, %v1139
          %vm1141 = vcmask 1040384
          %v1142 = vsel %vm1141, %v1140, -inf
          %1143 = vmax.xlane.f32.xlu0 %v1142
          %v1144 = vpop.xlane.xlu0 %1143
          %v1145 = vsub.f32 %v1140, %v1144
          %v1146 = vmul.f32 %v1145, 1.442695
          %v1147 = vpow.pop %v1146
          %v1148 = vsel %vm1141, %v1147, 0.0
          %1149 = vadd.xlane.f32.xlu0 %v1148
          %v1150 = vpop.xlane.xlu0 %1149
          %v1151 = vrcp.pop %v1150
          %v1152 = vmul.f32 %v1147, %v1151
          %1153 = vst [vmem:[%s239] sm:$0x1] %v1152
        $region48: #{tpu_custom_call.1} parent=39 // pred_fallthru
          _
        %s1154 = sand.u32 %s151, 1
        %s1155 = scalar_lea.sflag [#allocation4], %s1154
        %s1156 = sand.u32 %s151, 1
        %s1157 = scalar_lea.vmem [#allocation3], %s1156
        // Predicated region
        $region49: #{tpu_custom_call.1} parent=39 // pred_check
          %p1158 = pneg %p161
        $region50: #{tpu_custom_call.1} parent=39 // pred_check_branch
          %1160 = sbr.rel (%p1158) target = $region52
        $region51: #{tpu_custom_call.1} parent=39 // pred_region
          %s1162 = ssub.s32 16, 16
          %1163 = vsyncadd %s1155, %s1162
          %s1164 = smul.addr %s23, 16
          %s1165 = scalar_lea.hbm %s5, %s1164
          %s1167 = sshll.u32 %s1157, 4
          %s1168 = int_to_ptr.vmem [resolvable:$true] %s1167
          %1170 = dma.vmem_to_hbm [thread:$0]  %s1168, 16, %s1165, %s1155
        $region52: #{tpu_custom_call.1} parent=39 // pred_fallthru
          _
      $region40: #{tpu_custom_call.1} parent=5 // pred_fallthru
        _
      %p1171 = scmp.le.s32.totalorder 2, %s14
      // Predicated region
      $region53: #{tpu_custom_call.1} parent=5 // pred_check
        %p1172 = pneg %p1171
      $region54: #{tpu_custom_call.1} parent=5 // pred_check_branch
        %1174 = sbr.rel (%p1172) target = $region56
      $region55: #{tpu_custom_call.1} parent=5 // pred_region
        %s1175 = ssub.s32 %s14, 2
        // Predicated region
        $region57: #{tpu_custom_call.1} parent=55 // pred_check
          %p1176 = pneg %p167
        $region58: #{tpu_custom_call.1} parent=55 // pred_check_branch
          %1178 = sbr.rel (%p1176) target = $region60
        $region59: #{tpu_custom_call.1} parent=55 // pred_region
          %s1179 = sand.u32 %s152, 1
          %s1180 = scalar_lea.sflag [#allocation4], %s1179
          %s1181 = sand.u32 %s152, 1
          %s1182 = scalar_lea.vmem [#allocation3], %s1181
          %1183 = dma.done %s1180, 16
        $region60: #{tpu_custom_call.1} parent=55 // pred_fallthru
          _
      $region56: #{tpu_custom_call.1} parent=5 // pred_fallthru
        _
    $region6: #{tpu_custom_call.1} parent=1 // loop_footer
      %s18 = sadd.s32 1, %s14
    $region7: #{tpu_custom_call.1} parent=1 // loop_footer_branch
      %13 = sbr.rel target = $region3
    $region8: #{tpu_custom_call.1} parent=1 // loop_exit
      _
    %1184 = vsyncpa [#allocation4], 1
    %s1185 = scalar_lea.sflag [#allocation4], 1
    %1186 = vsyncpa %s1185, 1

</llo_original>
